<compile_context>
chip_gen: v5e
topology: v5e:2x2
jax: 0.10.0
libtpu: 0.0.40
codegen_flags: <defaults>
</compile_context>

<pallas_src>
import functools

import numpy as np

import jax
import jax.numpy as jnp
from jax import lax
from jax.experimental import pallas as pl
from jax.experimental.pallas import tpu as pltpu


def _conv_relu_kernel(x_ref, w_ref, b_ref, m_ref, o_ref, xbuf_ref, patch_ref,
                      *, W, halo):
    """One grid step: 3x3 conv (pad=1) + bias + ReLU for a tile of B images.

    x_ref:     (B, Cin, H*W)            input tile, spatial flattened on lanes
    w_ref:     (Cout, 9*Cin)            weights, columns ordered (kh, kw, cin)
    b_ref:     (Cout, 1)                bias
    m_ref:     (9, 1, H*W)              border masks (1.0 inside, 0.0 outside)
    o_ref:     (B, Cout, H*W)           output tile (lane-dense == NCHW layout)
    xbuf_ref:  (Cin, halo + H*W + halo) VMEM scratch: zero-haloed shift buffer
    patch_ref: (9*Cin, B*H*W)           VMEM scratch: im2col patch (whole tile)
    """
    B, Cin, HW = x_ref.shape

    w = w_ref[...]
    bias = b_ref[...]

    # Flattened-spatial shift per 3x3 tap, (kh outer, kw inner) to match the
    # weight / mask column ordering built in the wrapper. Taps with kw == 1
    # never wrap across rows (the zero halos cover the top/bottom pad), so
    # only the 6 horizontal-shift taps need the border mask.
    taps = [((kh - 1) * W + (kw - 1), kw != 1)
            for kh in range(3) for kw in range(3)]

    # In-kernel zero padding: halos stay zero, interior rewritten per image.
    xbuf_ref[...] = jnp.zeros_like(xbuf_ref)

    for b in range(B):
        # halo is a multiple of 128 -> unmasked, lane-aligned interior store.
        xbuf_ref[:, halo:halo + HW] = x_ref[b]

        # im2col: nine shifted (and, where needed, masked) views become the
        # per-image column block of one (9*Cin, B*HW) patch in VMEM.
        for t, (k, needs_mask) in enumerate(taps):
            tap = xbuf_ref[:, halo + k:halo + k + HW]          # (Cin, HW)
            if needs_mask:
                tap = tap * m_ref[t]
            patch_ref[t * Cin:(t + 1) * Cin, b * HW:(b + 1) * HW] = tap

    # One MXU matmul for the whole batch tile (K = 9*Cin, lane dim = B*HW),
    # f32 accumulation, then bias + ReLU on the VPU. Lane-dense stores.
    acc = jnp.dot(w, patch_ref[...], preferred_element_type=jnp.float32)
    acc = jnp.maximum(acc + bias, 0.0)
    for b in range(B):
        o_ref[b] = acc[:, b * HW:(b + 1) * HW].astype(o_ref.dtype)


def _border_masks(H, W, dtype):
    """(9, 1, H*W) masks: 1.0 where source pixel (h+dh, w+dw) is inside."""
    hh = np.arange(H).reshape(H, 1)
    ww = np.arange(W).reshape(1, W)
    masks = []
    for kh in range(3):
        for kw in range(3):
            dh, dw = kh - 1, kw - 1
            m = ((hh + dh >= 0) & (hh + dh < H) &
                 (ww + dw >= 0) & (ww + dw < W))
            masks.append(m.reshape(-1))
    return jnp.asarray(np.stack(masks, 0).reshape(9, 1, H * W), dtype=dtype)


def conv_relu_nchw(x_nchw, weight_oihw, bias, *, b_tile=None):
    """Matches PyTorch ConvRelu.forward: NCHW in -> NCHW out."""
    N, Cin, H, W = x_nchw.shape
    Cout = weight_oihw.shape[0]
    HW = H * W

    if b_tile is None:
        # Tiny problem: run the whole batch in one grid step (per-step pipeline
        # overhead ~0.35us would otherwise dominate). For large N pick a
        # smaller b_tile so 2x(in+out) blocks + the im2col patch fit VMEM
        # (64 MiB on v7x) and the parallel grid can feed both TensorCores.
        b_tile = N
    assert N % b_tile == 0, "b_tile must divide the batch size"

    # Lane-aligned zero halo (>= W+1, rounded up to a multiple of 128) so the
    # per-image interior write into the shift buffer is an unmasked store.
    halo = -(-(W + 1) // 128) * 128
    buf_w = halo + HW + halo

    # Free layout plumbing only (contiguous reshapes / tiny weight reorder):
    # no activation transposes and no jnp.pad of the input in HBM.
    x_flat = x_nchw.reshape(N, Cin, HW)
    w2d = jnp.transpose(weight_oihw, (0, 2, 3, 1)).reshape(Cout, 9 * Cin)
    b2d = bias.reshape(Cout, 1)
    masks = _border_masks(H, W, x_nchw.dtype)

    kernel = functools.partial(_conv_relu_kernel, W=W, halo=halo)

    out = pl.pallas_call(
        kernel,
        out_shape=jax.ShapeDtypeStruct((N, Cout, HW), x_nchw.dtype),
        grid_spec=pltpu.PrefetchScalarGridSpec(
            num_scalar_prefetch=0,
            grid=(N // b_tile,),
            in_specs=[
                pl.BlockSpec((b_tile, Cin, HW), lambda n: (n, 0, 0)),
                # Weights / bias / masks: whole-array VMEM residents --
                # DMA'd once, not pipelined, no double-buffering.
                pl.BlockSpec(memory_space=pltpu.MemorySpace.VMEM),
                pl.BlockSpec(memory_space=pltpu.MemorySpace.VMEM),
                pl.BlockSpec(memory_space=pltpu.MemorySpace.VMEM),
            ],
            out_specs=pl.BlockSpec((b_tile, Cout, HW), lambda n: (n, 0, 0)),
            scratch_shapes=[
                pltpu.VMEM((Cin, buf_w), x_nchw.dtype),
                pltpu.VMEM((9 * Cin, b_tile * HW), x_nchw.dtype),
            ],
        ),
        compiler_params=pltpu.CompilerParams(
            dimension_semantics=("parallel",),
            vmem_limit_bytes=32 * 1024 * 1024,
        ),
    )(x_flat, w2d, b2d, masks)

    # (N, Cout, H*W) -> (N, Cout, H, W): contiguous reshape, no transpose.
    return out.reshape(N, Cout, H, W)


if __name__ == "__main__":
    key = jax.random.PRNGKey(0)
    k_x, k_w, k_b = jax.random.split(key, 3)

    N, Cin, Cout, H, W = 2, 4, 8, 16, 16

    x = jax.random.normal(k_x, (N, Cin, H, W), dtype=jnp.float32)
    # Deterministic parameter init with the same fan-in scale as PyTorch's
    # default Conv2d init.
    fan_in = Cin * 3 * 3
    bound = 1.0 / (fan_in ** 0.5)
    weight = jax.random.uniform(
        k_w, (Cout, Cin, 3, 3), minval=-bound, maxval=bound, dtype=jnp.float32
    )
    bias = jax.random.uniform(
        k_b, (Cout,), minval=-bound, maxval=bound, dtype=jnp.float32
    )

    y = conv_relu_nchw(x, weight, bias)
    y = jax.block_until_ready(y)

    # Reference: XLA conv (same semantics as F.conv2d pad=1) + bias + ReLU.
    y_ref = lax.conv_general_dilated(
        x, weight, window_strides=(1, 1), padding=((1, 1), (1, 1)),
        dimension_numbers=("NCHW", "OIHW", "NCHW"),
    ) + bias[None, :, None, None]
    y_ref = jnp.maximum(y_ref, 0.0)

    assert y.shape == (N, Cout, H, W)
    assert jnp.allclose(y, y_ref, atol=1e-5, rtol=1e-5)
    print("KERNEL_OK")
</pallas_src>

<mosaic_0001>
module attributes {stable_mosaic.version = 11 : i64} {
  func.func @_conv_relu_kernel(%arg0: i32, %arg1: memref<2x4x256xf32, #tpu.memory_space<vmem>>, %arg2: memref<8x36xf32, #tpu.memory_space<vmem>>, %arg3: memref<8x1xf32, #tpu.memory_space<vmem>>, %arg4: memref<9x1x256xf32, #tpu.memory_space<vmem>>, %arg5: memref<2x8x256xf32, #tpu.memory_space<vmem>>, %arg6: memref<4x512xf32, #tpu.memory_space<vmem>>, %arg7: memref<36x512xf32, #tpu.memory_space<vmem>>) attributes {dimension_semantics = [#tpu.dimension_semantics<parallel>], iteration_bounds = array<i64: 1>, scalar_prefetch = 0 : i64, scratch_operands = 2 : i64, tpu.core_type = #tpu.core_type<tc>, window_params = [{transform_indices = @transform_0, window_bounds = array<i64: 2, 4, 256>}, {pipeline_mode = #tpu.pipeline_mode<synchronous>, transform_indices = @transform_1, window_bounds = array<i64: 8, 36>}, {pipeline_mode = #tpu.pipeline_mode<synchronous>, transform_indices = @transform_2, window_bounds = array<i64: 8, 1>}, {pipeline_mode = #tpu.pipeline_mode<synchronous>, transform_indices = @transform_3, window_bounds = array<i64: 9, 1, 256>}, {transform_indices = @transform_4, window_bounds = array<i64: 2, 8, 256>}]} {
    %c0 = arith.constant 0 : index
    %c0_0 = arith.constant 0 : index
    %0 = vector.load %arg2[%c0, %c0_0] : memref<8x36xf32, #tpu.memory_space<vmem>>, vector<8x36xf32>
    %c0_1 = arith.constant 0 : index
    %c0_2 = arith.constant 0 : index
    %1 = vector.load %arg3[%c0_1, %c0_2] : memref<8x1xf32, #tpu.memory_space<vmem>>, vector<8x1xf32>
    %cst = arith.constant 0.000000e+00 : f32
    %2 = vector.broadcast %cst : f32 to vector<4x512xf32>
    %c0_3 = arith.constant 0 : index
    %c0_4 = arith.constant 0 : index
    %3 = vector.load %arg6[%c0_3, %c0_4] : memref<4x512xf32, #tpu.memory_space<vmem>>, vector<4x512xf32>
    tpu.vector_store %arg6[%c0_3, %c0_4], %2 {strides = array<i32>} : memref<4x512xf32, #tpu.memory_space<vmem>>, vector<4x512xf32>,
    %c0_5 = arith.constant 0 : index
    %c0_6 = arith.constant 0 : index
    %c0_7 = arith.constant 0 : index
    %4 = vector.load %arg1[%c0_5, %c0_6, %c0_7] : memref<2x4x256xf32, #tpu.memory_space<vmem>>, vector<1x4x256xf32>
    %5 = vector.shape_cast %4 : vector<1x4x256xf32> to vector<4x256xf32>
    %c0_8 = arith.constant 0 : index
    %c128 = arith.constant 128 : index
    %6 = vector.load %arg6[%c0_8, %c128] : memref<4x512xf32, #tpu.memory_space<vmem>>, vector<4x256xf32>
    tpu.vector_store %arg6[%c0_8, %c128], %5 {strides = array<i32>} : memref<4x512xf32, #tpu.memory_space<vmem>>, vector<4x256xf32>,
    %c0_9 = arith.constant 0 : index
    %c111 = arith.constant 111 : index
    %7 = vector.load %arg6[%c0_9, %c111] : memref<4x512xf32, #tpu.memory_space<vmem>>, vector<4x256xf32>
    %c0_10 = arith.constant 0 : index
    %c0_11 = arith.constant 0 : index
    %c0_12 = arith.constant 0 : index
    %8 = vector.load %arg4[%c0_10, %c0_11, %c0_12] : memref<9x1x256xf32, #tpu.memory_space<vmem>>, vector<1x1x256xf32>
    %9 = vector.shape_cast %8 : vector<1x1x256xf32> to vector<1x256xf32>
    %10 = vector.broadcast %9 : vector<1x256xf32> to vector<4x256xf32>
    %11 = arith.mulf %7, %10 : vector<4x256xf32>
    %c0_13 = arith.constant 0 : index
    %c0_14 = arith.constant 0 : index
    %12 = vector.load %arg7[%c0_13, %c0_14] : memref<36x512xf32, #tpu.memory_space<vmem>>, vector<4x256xf32>
    tpu.vector_store %arg7[%c0_13, %c0_14], %11 {strides = array<i32>} : memref<36x512xf32, #tpu.memory_space<vmem>>, vector<4x256xf32>,
    %c0_15 = arith.constant 0 : index
    %c112 = arith.constant 112 : index
    %13 = vector.load %arg6[%c0_15, %c112] : memref<4x512xf32, #tpu.memory_space<vmem>>, vector<4x256xf32>
    %c4 = arith.constant 4 : index
    %c0_16 = arith.constant 0 : index
    %14 = vector.load %arg7[%c4, %c0_16] : memref<36x512xf32, #tpu.memory_space<vmem>>, vector<4x256xf32>
    tpu.vector_store %arg7[%c4, %c0_16], %13 {strides = array<i32>} : memref<36x512xf32, #tpu.memory_space<vmem>>, vector<4x256xf32>,
    %c0_17 = arith.constant 0 : index
    %c113 = arith.constant 113 : index
    %15 = vector.load %arg6[%c0_17, %c113] : memref<4x512xf32, #tpu.memory_space<vmem>>, vector<4x256xf32>
    %c2 = arith.constant 2 : index
    %c0_18 = arith.constant 0 : index
    %c0_19 = arith.constant 0 : index
    %16 = vector.load %arg4[%c2, %c0_18, %c0_19] : memref<9x1x256xf32, #tpu.memory_space<vmem>>, vector<1x1x256xf32>
    %17 = vector.shape_cast %16 : vector<1x1x256xf32> to vector<1x256xf32>
    %18 = vector.broadcast %17 : vector<1x256xf32> to vector<4x256xf32>
    %19 = arith.mulf %15, %18 : vector<4x256xf32>
    %c8 = arith.constant 8 : index
    %c0_20 = arith.constant 0 : index
    %20 = vector.load %arg7[%c8, %c0_20] : memref<36x512xf32, #tpu.memory_space<vmem>>, vector<4x256xf32>
    tpu.vector_store %arg7[%c8, %c0_20], %19 {strides = array<i32>} : memref<36x512xf32, #tpu.memory_space<vmem>>, vector<4x256xf32>,
    %c0_21 = arith.constant 0 : index
    %c127 = arith.constant 127 : index
    %21 = vector.load %arg6[%c0_21, %c127] : memref<4x512xf32, #tpu.memory_space<vmem>>, vector<4x256xf32>
    %c3 = arith.constant 3 : index
    %c0_22 = arith.constant 0 : index
    %c0_23 = arith.constant 0 : index
    %22 = vector.load %arg4[%c3, %c0_22, %c0_23] : memref<9x1x256xf32, #tpu.memory_space<vmem>>, vector<1x1x256xf32>
    %23 = vector.shape_cast %22 : vector<1x1x256xf32> to vector<1x256xf32>
    %24 = vector.broadcast %23 : vector<1x256xf32> to vector<4x256xf32>
    %25 = arith.mulf %21, %24 : vector<4x256xf32>
    %c12 = arith.constant 12 : index
    %c0_24 = arith.constant 0 : index
    %26 = vector.load %arg7[%c12, %c0_24] : memref<36x512xf32, #tpu.memory_space<vmem>>, vector<4x256xf32>
    tpu.vector_store %arg7[%c12, %c0_24], %25 {strides = array<i32>} : memref<36x512xf32, #tpu.memory_space<vmem>>, vector<4x256xf32>,
    %c0_25 = arith.constant 0 : index
    %c128_26 = arith.constant 128 : index
    %27 = vector.load %arg6[%c0_25, %c128_26] : memref<4x512xf32, #tpu.memory_space<vmem>>, vector<4x256xf32>
    %c16 = arith.constant 16 : index
    %c0_27 = arith.constant 0 : index
    %28 = vector.load %arg7[%c16, %c0_27] : memref<36x512xf32, #tpu.memory_space<vmem>>, vector<4x256xf32>
    tpu.vector_store %arg7[%c16, %c0_27], %27 {strides = array<i32>} : memref<36x512xf32, #tpu.memory_space<vmem>>, vector<4x256xf32>,
    %c0_28 = arith.constant 0 : index
    %c129 = arith.constant 129 : index
    %29 = vector.load %arg6[%c0_28, %c129] : memref<4x512xf32, #tpu.memory_space<vmem>>, vector<4x256xf32>
    %c5 = arith.constant 5 : index
    %c0_29 = arith.constant 0 : index
    %c0_30 = arith.constant 0 : index
    %30 = vector.load %arg4[%c5, %c0_29, %c0_30] : memref<9x1x256xf32, #tpu.memory_space<vmem>>, vector<1x1x256xf32>
    %31 = vector.shape_cast %30 : vector<1x1x256xf32> to vector<1x256xf32>
    %32 = vector.broadcast %31 : vector<1x256xf32> to vector<4x256xf32>
    %33 = arith.mulf %29, %32 : vector<4x256xf32>
    %c20 = arith.constant 20 : index
    %c0_31 = arith.constant 0 : index
    %34 = vector.load %arg7[%c20, %c0_31] : memref<36x512xf32, #tpu.memory_space<vmem>>, vector<4x256xf32>
    tpu.vector_store %arg7[%c20, %c0_31], %33 {strides = array<i32>} : memref<36x512xf32, #tpu.memory_space<vmem>>, vector<4x256xf32>,
    %c0_32 = arith.constant 0 : index
    %c143 = arith.constant 143 : index
    %35 = vector.load %arg6[%c0_32, %c143] : memref<4x512xf32, #tpu.memory_space<vmem>>, vector<4x256xf32>
    %c6 = arith.constant 6 : index
    %c0_33 = arith.constant 0 : index
    %c0_34 = arith.constant 0 : index
    %36 = vector.load %arg4[%c6, %c0_33, %c0_34] : memref<9x1x256xf32, #tpu.memory_space<vmem>>, vector<1x1x256xf32>
    %37 = vector.shape_cast %36 : vector<1x1x256xf32> to vector<1x256xf32>
    %38 = vector.broadcast %37 : vector<1x256xf32> to vector<4x256xf32>
    %39 = arith.mulf %35, %38 : vector<4x256xf32>
    %c24 = arith.constant 24 : index
    %c0_35 = arith.constant 0 : index
    %40 = vector.load %arg7[%c24, %c0_35] : memref<36x512xf32, #tpu.memory_space<vmem>>, vector<4x256xf32>
    tpu.vector_store %arg7[%c24, %c0_35], %39 {strides = array<i32>} : memref<36x512xf32, #tpu.memory_space<vmem>>, vector<4x256xf32>,
    %c0_36 = arith.constant 0 : index
    %c144 = arith.constant 144 : index
    %41 = vector.load %arg6[%c0_36, %c144] : memref<4x512xf32, #tpu.memory_space<vmem>>, vector<4x256xf32>
    %c28 = arith.constant 28 : index
    %c0_37 = arith.constant 0 : index
    %42 = vector.load %arg7[%c28, %c0_37] : memref<36x512xf32, #tpu.memory_space<vmem>>, vector<4x256xf32>
    tpu.vector_store %arg7[%c28, %c0_37], %41 {strides = array<i32>} : memref<36x512xf32, #tpu.memory_space<vmem>>, vector<4x256xf32>,
    %c0_38 = arith.constant 0 : index
    %c145 = arith.constant 145 : index
    %43 = vector.load %arg6[%c0_38, %c145] : memref<4x512xf32, #tpu.memory_space<vmem>>, vector<4x256xf32>
    %c8_39 = arith.constant 8 : index
    %c0_40 = arith.constant 0 : index
    %c0_41 = arith.constant 0 : index
    %44 = vector.load %arg4[%c8_39, %c0_40, %c0_41] : memref<9x1x256xf32, #tpu.memory_space<vmem>>, vector<1x1x256xf32>
    %45 = vector.shape_cast %44 : vector<1x1x256xf32> to vector<1x256xf32>
    %46 = vector.broadcast %45 : vector<1x256xf32> to vector<4x256xf32>
    %47 = arith.mulf %43, %46 : vector<4x256xf32>
    %c32 = arith.constant 32 : index
    %c0_42 = arith.constant 0 : index
    %48 = vector.load %arg7[%c32, %c0_42] : memref<36x512xf32, #tpu.memory_space<vmem>>, vector<4x256xf32>
    tpu.vector_store %arg7[%c32, %c0_42], %47 {strides = array<i32>} : memref<36x512xf32, #tpu.memory_space<vmem>>, vector<4x256xf32>,
    %c1 = arith.constant 1 : index
    %c0_43 = arith.constant 0 : index
    %c0_44 = arith.constant 0 : index
    %49 = vector.load %arg1[%c1, %c0_43, %c0_44] : memref<2x4x256xf32, #tpu.memory_space<vmem>>, vector<1x4x256xf32>
    %50 = vector.shape_cast %49 : vector<1x4x256xf32> to vector<4x256xf32>
    %c0_45 = arith.constant 0 : index
    %c128_46 = arith.constant 128 : index
    %51 = vector.load %arg6[%c0_45, %c128_46] : memref<4x512xf32, #tpu.memory_space<vmem>>, vector<4x256xf32>
    tpu.vector_store %arg6[%c0_45, %c128_46], %50 {strides = array<i32>} : memref<4x512xf32, #tpu.memory_space<vmem>>, vector<4x256xf32>,
    %c0_47 = arith.constant 0 : index
    %c111_48 = arith.constant 111 : index
    %52 = vector.load %arg6[%c0_47, %c111_48] : memref<4x512xf32, #tpu.memory_space<vmem>>, vector<4x256xf32>
    %c0_49 = arith.constant 0 : index
    %c0_50 = arith.constant 0 : index
    %c0_51 = arith.constant 0 : index
    %53 = vector.load %arg4[%c0_49, %c0_50, %c0_51] : memref<9x1x256xf32, #tpu.memory_space<vmem>>, vector<1x1x256xf32>
    %54 = vector.shape_cast %53 : vector<1x1x256xf32> to vector<1x256xf32>
    %55 = vector.broadcast %54 : vector<1x256xf32> to vector<4x256xf32>
    %56 = arith.mulf %52, %55 : vector<4x256xf32>
    %c0_52 = arith.constant 0 : index
    %c256 = arith.constant 256 : index
    %57 = vector.load %arg7[%c0_52, %c256] : memref<36x512xf32, #tpu.memory_space<vmem>>, vector<4x256xf32>
    tpu.vector_store %arg7[%c0_52, %c256], %56 {strides = array<i32>} : memref<36x512xf32, #tpu.memory_space<vmem>>, vector<4x256xf32>,
    %c0_53 = arith.constant 0 : index
    %c112_54 = arith.constant 112 : index
    %58 = vector.load %arg6[%c0_53, %c112_54] : memref<4x512xf32, #tpu.memory_space<vmem>>, vector<4x256xf32>
    %c4_55 = arith.constant 4 : index
    %c256_56 = arith.constant 256 : index
    %59 = vector.load %arg7[%c4_55, %c256_56] : memref<36x512xf32, #tpu.memory_space<vmem>>, vector<4x256xf32>
    tpu.vector_store %arg7[%c4_55, %c256_56], %58 {strides = array<i32>} : memref<36x512xf32, #tpu.memory_space<vmem>>, vector<4x256xf32>,
    %c0_57 = arith.constant 0 : index
    %c113_58 = arith.constant 113 : index
    %60 = vector.load %arg6[%c0_57, %c113_58] : memref<4x512xf32, #tpu.memory_space<vmem>>, vector<4x256xf32>
    %c2_59 = arith.constant 2 : index
    %c0_60 = arith.constant 0 : index
    %c0_61 = arith.constant 0 : index
    %61 = vector.load %arg4[%c2_59, %c0_60, %c0_61] : memref<9x1x256xf32, #tpu.memory_space<vmem>>, vector<1x1x256xf32>
    %62 = vector.shape_cast %61 : vector<1x1x256xf32> to vector<1x256xf32>
    %63 = vector.broadcast %62 : vector<1x256xf32> to vector<4x256xf32>
    %64 = arith.mulf %60, %63 : vector<4x256xf32>
    %c8_62 = arith.constant 8 : index
    %c256_63 = arith.constant 256 : index
    %65 = vector.load %arg7[%c8_62, %c256_63] : memref<36x512xf32, #tpu.memory_space<vmem>>, vector<4x256xf32>
    tpu.vector_store %arg7[%c8_62, %c256_63], %64 {strides = array<i32>} : memref<36x512xf32, #tpu.memory_space<vmem>>, vector<4x256xf32>,
    %c0_64 = arith.constant 0 : index
    %c127_65 = arith.constant 127 : index
    %66 = vector.load %arg6[%c0_64, %c127_65] : memref<4x512xf32, #tpu.memory_space<vmem>>, vector<4x256xf32>
    %c3_66 = arith.constant 3 : index
    %c0_67 = arith.constant 0 : index
    %c0_68 = arith.constant 0 : index
    %67 = vector.load %arg4[%c3_66, %c0_67, %c0_68] : memref<9x1x256xf32, #tpu.memory_space<vmem>>, vector<1x1x256xf32>
    %68 = vector.shape_cast %67 : vector<1x1x256xf32> to vector<1x256xf32>
    %69 = vector.broadcast %68 : vector<1x256xf32> to vector<4x256xf32>
    %70 = arith.mulf %66, %69 : vector<4x256xf32>
    %c12_69 = arith.constant 12 : index
    %c256_70 = arith.constant 256 : index
    %71 = vector.load %arg7[%c12_69, %c256_70] : memref<36x512xf32, #tpu.memory_space<vmem>>, vector<4x256xf32>
    tpu.vector_store %arg7[%c12_69, %c256_70], %70 {strides = array<i32>} : memref<36x512xf32, #tpu.memory_space<vmem>>, vector<4x256xf32>,
    %c0_71 = arith.constant 0 : index
    %c128_72 = arith.constant 128 : index
    %72 = vector.load %arg6[%c0_71, %c128_72] : memref<4x512xf32, #tpu.memory_space<vmem>>, vector<4x256xf32>
    %c16_73 = arith.constant 16 : index
    %c256_74 = arith.constant 256 : index
    %73 = vector.load %arg7[%c16_73, %c256_74] : memref<36x512xf32, #tpu.memory_space<vmem>>, vector<4x256xf32>
    tpu.vector_store %arg7[%c16_73, %c256_74], %72 {strides = array<i32>} : memref<36x512xf32, #tpu.memory_space<vmem>>, vector<4x256xf32>,
    %c0_75 = arith.constant 0 : index
    %c129_76 = arith.constant 129 : index
    %74 = vector.load %arg6[%c0_75, %c129_76] : memref<4x512xf32, #tpu.memory_space<vmem>>, vector<4x256xf32>
    %c5_77 = arith.constant 5 : index
    %c0_78 = arith.constant 0 : index
    %c0_79 = arith.constant 0 : index
    %75 = vector.load %arg4[%c5_77, %c0_78, %c0_79] : memref<9x1x256xf32, #tpu.memory_space<vmem>>, vector<1x1x256xf32>
    %76 = vector.shape_cast %75 : vector<1x1x256xf32> to vector<1x256xf32>
    %77 = vector.broadcast %76 : vector<1x256xf32> to vector<4x256xf32>
    %78 = arith.mulf %74, %77 : vector<4x256xf32>
    %c20_80 = arith.constant 20 : index
    %c256_81 = arith.constant 256 : index
    %79 = vector.load %arg7[%c20_80, %c256_81] : memref<36x512xf32, #tpu.memory_space<vmem>>, vector<4x256xf32>
    tpu.vector_store %arg7[%c20_80, %c256_81], %78 {strides = array<i32>} : memref<36x512xf32, #tpu.memory_space<vmem>>, vector<4x256xf32>,
    %c0_82 = arith.constant 0 : index
    %c143_83 = arith.constant 143 : index
    %80 = vector.load %arg6[%c0_82, %c143_83] : memref<4x512xf32, #tpu.memory_space<vmem>>, vector<4x256xf32>
    %c6_84 = arith.constant 6 : index
    %c0_85 = arith.constant 0 : index
    %c0_86 = arith.constant 0 : index
    %81 = vector.load %arg4[%c6_84, %c0_85, %c0_86] : memref<9x1x256xf32, #tpu.memory_space<vmem>>, vector<1x1x256xf32>
    %82 = vector.shape_cast %81 : vector<1x1x256xf32> to vector<1x256xf32>
    %83 = vector.broadcast %82 : vector<1x256xf32> to vector<4x256xf32>
    %84 = arith.mulf %80, %83 : vector<4x256xf32>
    %c24_87 = arith.constant 24 : index
    %c256_88 = arith.constant 256 : index
    %85 = vector.load %arg7[%c24_87, %c256_88] : memref<36x512xf32, #tpu.memory_space<vmem>>, vector<4x256xf32>
    tpu.vector_store %arg7[%c24_87, %c256_88], %84 {strides = array<i32>} : memref<36x512xf32, #tpu.memory_space<vmem>>, vector<4x256xf32>,
    %c0_89 = arith.constant 0 : index
    %c144_90 = arith.constant 144 : index
    %86 = vector.load %arg6[%c0_89, %c144_90] : memref<4x512xf32, #tpu.memory_space<vmem>>, vector<4x256xf32>
    %c28_91 = arith.constant 28 : index
    %c256_92 = arith.constant 256 : index
    %87 = vector.load %arg7[%c28_91, %c256_92] : memref<36x512xf32, #tpu.memory_space<vmem>>, vector<4x256xf32>
    tpu.vector_store %arg7[%c28_91, %c256_92], %86 {strides = array<i32>} : memref<36x512xf32, #tpu.memory_space<vmem>>, vector<4x256xf32>,
    %c0_93 = arith.constant 0 : index
    %c145_94 = arith.constant 145 : index
    %88 = vector.load %arg6[%c0_93, %c145_94] : memref<4x512xf32, #tpu.memory_space<vmem>>, vector<4x256xf32>
    %c8_95 = arith.constant 8 : index
    %c0_96 = arith.constant 0 : index
    %c0_97 = arith.constant 0 : index
    %89 = vector.load %arg4[%c8_95, %c0_96, %c0_97] : memref<9x1x256xf32, #tpu.memory_space<vmem>>, vector<1x1x256xf32>
    %90 = vector.shape_cast %89 : vector<1x1x256xf32> to vector<1x256xf32>
    %91 = vector.broadcast %90 : vector<1x256xf32> to vector<4x256xf32>
    %92 = arith.mulf %88, %91 : vector<4x256xf32>
    %c32_98 = arith.constant 32 : index
    %c256_99 = arith.constant 256 : index
    %93 = vector.load %arg7[%c32_98, %c256_99] : memref<36x512xf32, #tpu.memory_space<vmem>>, vector<4x256xf32>
    tpu.vector_store %arg7[%c32_98, %c256_99], %92 {strides = array<i32>} : memref<36x512xf32, #tpu.memory_space<vmem>>, vector<4x256xf32>,
    %c0_100 = arith.constant 0 : index
    %c0_101 = arith.constant 0 : index
    %94 = vector.load %arg7[%c0_100, %c0_101] : memref<36x512xf32, #tpu.memory_space<vmem>>, vector<36x512xf32>
    %cst_102 = arith.constant dense<0.000000e+00> : vector<8x512xf32>
    %95 = tpu.matmul %0, %94, %cst_102 {dimension_numbers = #tpu.dot_dimension_numbers<[1], [0], [0], [1], [0, 0, 1, 1], [], []>} : vector<8x36xf32>, vector<36x512xf32>, vector<8x512xf32> -> vector<8x512xf32>
    %96 = vector.broadcast %1 : vector<8x1xf32> to vector<8x512xf32>
    %97 = arith.addf %95, %96 : vector<8x512xf32>
    %cst_103 = arith.constant 0.000000e+00 : f32
    %98 = vector.broadcast %cst_103 : f32 to vector<8x512xf32>
    %99 = arith.maximumf %97, %98 : vector<8x512xf32>
    %100 = vector.extract_strided_slice %99 {offsets = [0, 0], sizes = [8, 256], strides = [1, 1]} : vector<8x512xf32> to vector<8x256xf32>
    %c0_104 = arith.constant 0 : index
    %c0_105 = arith.constant 0 : index
    %c0_106 = arith.constant 0 : index
    %101 = vector.load %arg5[%c0_104, %c0_105, %c0_106] : memref<2x8x256xf32, #tpu.memory_space<vmem>>, vector<1x8x256xf32>
    %102 = vector.shape_cast %101 : vector<1x8x256xf32> to vector<8x256xf32>
    %103 = vector.shape_cast %100 : vector<8x256xf32> to vector<1x8x256xf32>
    tpu.vector_store %arg5[%c0_104, %c0_105, %c0_106], %103 {strides = array<i32>} : memref<2x8x256xf32, #tpu.memory_space<vmem>>, vector<1x8x256xf32>,
    %104 = vector.extract_strided_slice %99 {offsets = [0, 256], sizes = [8, 256], strides = [1, 1]} : vector<8x512xf32> to vector<8x256xf32>
    %c1_107 = arith.constant 1 : index
    %c0_108 = arith.constant 0 : index
    %c0_109 = arith.constant 0 : index
    %105 = vector.load %arg5[%c1_107, %c0_108, %c0_109] : memref<2x8x256xf32, #tpu.memory_space<vmem>>, vector<1x8x256xf32>
    %106 = vector.shape_cast %105 : vector<1x8x256xf32> to vector<8x256xf32>
    %107 = vector.shape_cast %104 : vector<8x256xf32> to vector<1x8x256xf32>
    tpu.vector_store %arg5[%c1_107, %c0_108, %c0_109], %107 {strides = array<i32>} : memref<2x8x256xf32, #tpu.memory_space<vmem>>, vector<1x8x256xf32>,
    return
  }
  func.func @transform_0(%arg0: i32) -> (i32, i32, i32) {
    %c0_i32 = arith.constant 0 : i32
    %c0_i32_0 = arith.constant 0 : i32
    %c0_i32_1 = arith.constant 0 : i32
    return %arg0, %c0_i32, %c0_i32_0 : i32, i32, i32
  }
  func.func @transform_1(%arg0: i32) -> (i32, i32) {
    %c0_i32 = arith.constant 0 : i32
    %c0_i32_0 = arith.constant 0 : i32
    %c0_i32_1 = arith.constant 0 : i32
    return %c0_i32, %c0_i32_0 : i32, i32
  }
  func.func @transform_2(%arg0: i32) -> (i32, i32) {
    %c0_i32 = arith.constant 0 : i32
    %c0_i32_0 = arith.constant 0 : i32
    %c0_i32_1 = arith.constant 0 : i32
    return %c0_i32, %c0_i32_0 : i32, i32
  }
  func.func @transform_3(%arg0: i32) -> (i32, i32, i32) {
    %c0_i32 = arith.constant 0 : i32
    %c0_i32_0 = arith.constant 0 : i32
    %c0_i32_1 = arith.constant 0 : i32
    %c0_i32_2 = arith.constant 0 : i32
    return %c0_i32, %c0_i32_0, %c0_i32_1 : i32, i32, i32
  }
  func.func @transform_4(%arg0: i32) -> (i32, i32, i32) {
    %c0_i32 = arith.constant 0 : i32
    %c0_i32_0 = arith.constant 0 : i32
    %c0_i32_1 = arith.constant 0 : i32
    return %arg0, %c0_i32, %c0_i32_0 : i32, i32, i32
  }
}

</mosaic_0001>

<llo_original>
// kernel: tpu_custom_call.1
$region0: #{tpu_custom_call.1}
  #allocation0 [shape = 'u32[]', space=smem, size = 0x4, offset = 0x4, fixed_abs, tag = 'smem constant byte address 0x4 - core index']
  #allocation1 [shape = 'u32[72,128]{1,0:T(1,128)}', space=vmem, size = 0x9000, scoped, tag = 'internal scratch']
  #allocation2 [shape = 'f32[4,512]{1,0:T(4,128)}', space=vmem, size = 0x2000, scoped, tag = 'scratch operand']
  #allocation3 [shape = 'f32[36,512]{1,0:T(8,128)}', space=vmem, size = 0x14000, scoped, tag = 'scratch operand']
  %s0 = inlined_call_operand.hbm [shape: f32[2,4,256], index: 0, kind: input, shape index: {}]
  %s1 = inlined_call_operand.vmem [shape: f32[8,36], index: 1, kind: input, shape index: {}]
  %s2 = inlined_call_operand.vmem [shape: f32[8,1], index: 2, kind: input, shape index: {}]
  %s3 = inlined_call_operand.hbm [shape: f32[9,1,256], index: 3, kind: input, shape index: {}]
  %s4 = inlined_call_operand.hbm [shape: f32[2,8,256], index: 4, kind: output, shape index: {}]
  %s5 = sld [smem:[#allocation0]]
  $region34: #{tpu_custom_call.1} parent=0
    _
  %s7 = ssub.s32 1, %s5
  %s8 = scalar_select 0, %s7, %s5
  $region1: #{tpu_custom_call.1} parent=0
    #allocation4 [shape = 'u8[8192]{0}', space=vmem, size = 0x2000, scoped, tag = 'input window, operand 0, single buffered']
    #allocation5 [shape = 's32[1]{0}', space=sflag, size = 0x4, scoped, tag = 'scoped memory for tpu_custom_call.1']
    #allocation6 [shape = 's32[1]{0}', space=sflag, size = 0x4, scoped, tag = 'scoped memory for tpu_custom_call.1']
    #allocation7 [shape = 'u8[9216]{0}', space=vmem, size = 0x2400, scoped, tag = 'input window, operand 3, single buffered']
    #allocation8 [shape = 's32[1]{0}', space=sflag, size = 0x4, scoped, tag = 'scoped memory for tpu_custom_call.1']
    #allocation9 [shape = 'u8[16384]{0}', space=vmem, size = 0x4000, scoped, tag = 'output window, operand 0, single buffered']
    %9 = vsyncpa [#allocation5], 0
    %10 = vsyncpa [#allocation8], 0
    %11 = vsyncpa [#allocation6], 0
    // Predicated region
    $region2: #{tpu_custom_call.1} parent=1 // pred_check
      _
    $region3: #{tpu_custom_call.1} parent=1 // pred_check_branch
      %13 = sbr.rel (0) target = $region5
    $region4: #{tpu_custom_call.1} parent=1 // pred_region
      %15 = vsyncadd [#allocation5], 0
      %s16 = sshll.u32 %s0, 4
      %s17 = int_to_ptr.hbm [resolvable:$true] %s16
      %s18 = sshll.u32 [#allocation4], 4
      %s19 = int_to_ptr.vmem [resolvable:$true] %s18
      %24 = dma.hbm_to_vmem [thread:$0]  %s17, 256, %s19, [#allocation5], 128, 128, 8
    $region5: #{tpu_custom_call.1} parent=1 // pred_fallthru
      _
    // Predicated region
    $region6: #{tpu_custom_call.1} parent=1 // pred_check
      _
    $region7: #{tpu_custom_call.1} parent=1 // pred_check_branch
      %26 = sbr.rel (0) target = $region9
    $region8: #{tpu_custom_call.1} parent=1 // pred_region
      _
    $region9: #{tpu_custom_call.1} parent=1 // pred_fallthru
      _
    // Predicated region
    $region10: #{tpu_custom_call.1} parent=1 // pred_check
      _
    $region11: #{tpu_custom_call.1} parent=1 // pred_check_branch
      %28 = sbr.rel (0) target = $region13
    $region12: #{tpu_custom_call.1} parent=1 // pred_region
      _
    $region13: #{tpu_custom_call.1} parent=1 // pred_fallthru
      _
    // Predicated region
    $region14: #{tpu_custom_call.1} parent=1 // pred_check
      _
    $region15: #{tpu_custom_call.1} parent=1 // pred_check_branch
      %30 = sbr.rel (0) target = $region17
    $region16: #{tpu_custom_call.1} parent=1 // pred_region
      %32 = vsyncadd [#allocation8], 0
      %s33 = sshll.u32 %s3, 4
      %s34 = int_to_ptr.hbm [resolvable:$true] %s33
      %s35 = sshll.u32 [#allocation7], 4
      %s36 = int_to_ptr.vmem [resolvable:$true] %s35
      %41 = dma.hbm_to_vmem [thread:$0]  %s34, 288, %s36, [#allocation8], 32, 32, 2
    $region17: #{tpu_custom_call.1} parent=1 // pred_fallthru
      _
    // Predicated region
    $region18: #{tpu_custom_call.1} parent=1 // pred_check
      _
    $region19: #{tpu_custom_call.1} parent=1 // pred_check_branch
      %43 = sbr.rel (0) target = $region21
    $region20: #{tpu_custom_call.1} parent=1 // pred_region
      %45 = dma.done [#allocation5], 256
    $region21: #{tpu_custom_call.1} parent=1 // pred_fallthru
      _
    // Predicated region
    $region22: #{tpu_custom_call.1} parent=1 // pred_check
      _
    $region23: #{tpu_custom_call.1} parent=1 // pred_check_branch
      %47 = sbr.rel (0) target = $region25
    $region24: #{tpu_custom_call.1} parent=1 // pred_region
      %49 = dma.done [#allocation8], 288
    $region25: #{tpu_custom_call.1} parent=1 // pred_fallthru
      _
    %v50 = vld [vmem:[%s1] sm:$0xff]
    %v51 = vld [vmem:[%s2] sm:$0xff]
    %52 = vst [vmem:[#allocation2] sm:$0xff] 0.0
    %53 = vst [vmem:[#allocation2 + $0x8] sm:$0xff] 0.0
    %v54 = vld [vmem:[#allocation4] sm:$0xff]
    %55 = vst [vmem:[#allocation2 + $0x4] sm:$0xff] %v54
    %v56 = vld [vmem:[#allocation2] sm:$0xff]
    %v57 = vld [vmem:[#allocation2 + $0x8] sm:$0xf]
    %v58 = vld [vmem:[#allocation7] sm:$0x3]
    %v60 = vperm.slane %v58, 0
    %v61 = vperm.slane %v58, 1
    %v62 = vrot.slane %v61, 4
    %vm63 = vcmask 1043456
    %v64 = vsel %vm63, %v60, %v62
    %65 = vrot.lane.b32.xlu0 %v64, 111
    %v66 = vpop.permute.xlu0 %65
    %v67 = vrot.slane %v66, 4
    %vm68 = vcmask 908288
    %v69 = vsel %vm68, %v67, %v66
    %v72 = vmul.f32 %v56, %v69
    %v73 = vmul.f32 %v57, %v67
    %76 = vst [vmem:[#allocation1] ss:$2 sm:$0xff] %v72
    %s77 = scalar_lea.vmem [#allocation1], 16
    %78 = vst [vmem:[%s77] ss:$2 sm:$0xff] %v73
    %v79 = vld.sshfl [vmem:[#allocation1] sm:$0xff pattern:$0x75316420]
    %v80 = vld.sshfl [vmem:[#allocation1 + $0x8] sm:$0xff pattern:$0x75316420]
    %v81 = vld.sshfl [vmem:[#allocation1 + $0x10] sm:$0xff pattern:$0x75316420]
    %82 = vrot.lane.b32.xlu0 %v79, 17
    %v83 = vpop.permute.xlu0 %82
    %84 = vrot.lane.b32.xlu0 %v80, 17
    %v85 = vpop.permute.xlu0 %84
    %86 = vrot.lane.b32.xlu0 %v81, 17
    %v87 = vpop.permute.xlu0 %86
    %vm88 = vcmask 138240
    %v89 = vsel %vm88, %v83, %v85
    %v90 = vsel %vm88, %v85, %v87
    %93 = vst [vmem:[#allocation3] sm:$0xf] %v89
    %94 = vst [vmem:[#allocation3 + $0x8] sm:$0xf] %v90
    %v95 = vld [vmem:[#allocation2] sm:$0xff]
    %v96 = vld [vmem:[#allocation2 + $0x8] sm:$0xf]
    %s99 = scalar_lea.vmem [#allocation1], 1
    %100 = vst [vmem:[%s99] ss:$2 sm:$0xff] %v95
    %s101 = scalar_lea.vmem [#allocation1], 17
    %102 = vst [vmem:[%s101] ss:$2 sm:$0xff] %v96
    %v103 = vld.sshfl [vmem:[#allocation1] sm:$0xff pattern:$0x75316420]
    %v104 = vld.sshfl [vmem:[#allocation1 + $0x8] sm:$0xff pattern:$0x75316420]
    %v105 = vld.sshfl [vmem:[#allocation1 + $0x10] sm:$0xff pattern:$0x75316420]
    %106 = vrot.lane.b32.xlu0 %v103, 16
    %v107 = vpop.permute.xlu0 %106
    %108 = vrot.lane.b32.xlu0 %v104, 16
    %v109 = vpop.permute.xlu0 %108
    %110 = vrot.lane.b32.xlu0 %v105, 16
    %v111 = vpop.permute.xlu0 %110
    %vm112 = vcmask 130048
    %v113 = vsel %vm112, %v107, %v109
    %v114 = vsel %vm112, %v109, %v111
    %117 = vst [vmem:[#allocation3] sm:$0xf0] %v113
    %118 = vst [vmem:[#allocation3 + $0x8] sm:$0xf0] %v114
    %v119 = vld [vmem:[#allocation2] sm:$0xff]
    %v120 = vld [vmem:[#allocation2 + $0x8] sm:$0xf]
    %s121 = scalar_lea.vmem [#allocation7], 4
    %v122 = vld [vmem:[%s121] sm:$0x3]
    %v124 = vperm.slane %v122, 0
    %v125 = vperm.slane %v122, 1
    %v126 = vrot.slane %v125, 4
    %v127 = vsel %vm63, %v124, %v126
    %128 = vrot.lane.b32.xlu0 %v127, 113
    %v129 = vpop.permute.xlu0 %128
    %v130 = vrot.slane %v129, 4
    %vm131 = vcmask 924672
    %v132 = vsel %vm131, %v130, %v129
    %v135 = vmul.f32 %v119, %v132
    %v136 = vmul.f32 %v120, %v130
    %139 = vst [vmem:[#allocation1] ss:$2 sm:$0xff] %v135
    %s140 = scalar_lea.vmem [#allocation1], 16
    %141 = vst [vmem:[%s140] ss:$2 sm:$0xff] %v136
    %v142 = vld.sshfl [vmem:[#allocation1] sm:$0xff pattern:$0x75316420]
    %v143 = vld.sshfl [vmem:[#allocation1 + $0x8] sm:$0xff pattern:$0x75316420]
    %v144 = vld.sshfl [vmem:[#allocation1 + $0x10] sm:$0xff pattern:$0x75316420]
    %145 = vrot.lane.b32.xlu0 %v142, 15
    %v146 = vpop.permute.xlu0 %145
    %147 = vrot.lane.b32.xlu0 %v143, 15
    %v148 = vpop.permute.xlu0 %147
    %149 = vrot.lane.b32.xlu0 %v144, 15
    %v150 = vpop.permute.xlu0 %149
    %vm151 = vcmask 121856
    %v152 = vsel %vm151, %v146, %v148
    %v153 = vsel %vm151, %v148, %v150
    %156 = vst [vmem:[#allocation3 + $0x20] sm:$0xf] %v152
    %157 = vst [vmem:[#allocation3 + $0x28] sm:$0xf] %v153
    %v158 = vld [vmem:[#allocation2] sm:$0xff]
    %v159 = vld [vmem:[#allocation2 + $0x8] sm:$0xf]
    %s160 = scalar_lea.vmem [#allocation7], 6
    %v161 = vld [vmem:[%s160] sm:$0x3]
    %v163 = vperm.slane %v161, 0
    %v164 = vperm.slane %v161, 1
    %v165 = vrot.slane %v164, 4
    %v166 = vsel %vm63, %v163, %v165
    %167 = vrot.lane.b32.xlu0 %v166, 127
    %v168 = vpop.permute.xlu0 %167
    %v169 = vrot.slane %v168, 4
    %vm170 = vcmask 1039360
    %v171 = vsel %vm170, %v169, %v168
    %v174 = vmul.f32 %v158, %v171
    %v175 = vmul.f32 %v159, %v169
    %s178 = scalar_lea.vmem [#allocation1], 1
    %179 = vst [vmem:[%s178] ss:$2 sm:$0xff] %v174
    %s180 = scalar_lea.vmem [#allocation1], 17
    %181 = vst [vmem:[%s180] ss:$2 sm:$0xff] %v175
    %v182 = vld.sshfl [vmem:[#allocation1] sm:$0xff pattern:$0x75316420]
    %v183 = vld.sshfl [vmem:[#allocation1 + $0x8] sm:$0xff pattern:$0x75316420]
    %v184 = vld.sshfl [vmem:[#allocation1 + $0x10] sm:$0xff pattern:$0x75316420]
    %185 = vrot.lane.b32.xlu0 %v182, 1
    %v186 = vpop.permute.xlu0 %185
    %187 = vrot.lane.b32.xlu0 %v183, 1
    %v188 = vpop.permute.xlu0 %187
    %189 = vrot.lane.b32.xlu0 %v184, 1
    %v190 = vpop.permute.xlu0 %189
    %vm191 = vcmask 7168
    %v192 = vsel %vm191, %v186, %v188
    %v193 = vsel %vm191, %v188, %v190
    %196 = vst [vmem:[#allocation3 + $0x20] sm:$0xf0] %v192
    %197 = vst [vmem:[#allocation3 + $0x28] sm:$0xf0] %v193
    %v198 = vld [vmem:[#allocation2 + $0x4] sm:$0xff]
    %200 = vst [vmem:[#allocation1] ss:$2 sm:$0xff] %v198
    %v201 = vld.sshfl [vmem:[#allocation1] sm:$0xff pattern:$0x75316420]
    %v202 = vld.sshfl [vmem:[#allocation1 + $0x8] sm:$0xff pattern:$0x75316420]
    %205 = vst [vmem:[#allocation3 + $0x40] sm:$0xf] %v201
    %206 = vst [vmem:[#allocation3 + $0x48] sm:$0xf] %v202
    %v207 = vld [vmem:[#allocation2 + $0x4] sm:$0xff]
    %v208 = vld [vmem:[#allocation2 + $0xc] sm:$0xf]
    %s209 = scalar_lea.vmem [#allocation7], 10
    %v210 = vld [vmem:[%s209] sm:$0x3]
    %v212 = vperm.slane %v210, 0
    %v213 = vperm.slane %v210, 1
    %v214 = vrot.slane %v213, 4
    %v215 = vsel %vm63, %v212, %v214
    %216 = vrot.lane.b32.xlu0 %v215, 1
    %v217 = vpop.permute.xlu0 %216
    %v218 = vrot.slane %v217, 4
    %v219 = vsel %vm191, %v218, %v217
    %v222 = vmul.f32 %v207, %v219
    %v223 = vmul.f32 %v208, %v218
    %s226 = scalar_lea.vmem [#allocation1], 1
    %227 = vst [vmem:[%s226] ss:$2 sm:$0xff] %v222
    %s228 = scalar_lea.vmem [#allocation1], 17
    %229 = vst [vmem:[%s228] ss:$2 sm:$0xff] %v223
    %v230 = vld.sshfl [vmem:[#allocation1] sm:$0xff pattern:$0x75316420]
    %v231 = vld.sshfl [vmem:[#allocation1 + $0x8] sm:$0xff pattern:$0x75316420]
    %v232 = vld.sshfl [vmem:[#allocation1 + $0x10] sm:$0xff pattern:$0x75316420]
    %233 = vrot.lane.b32.xlu0 %v230, 127
    %v234 = vpop.permute.xlu0 %233
    %235 = vrot.lane.b32.xlu0 %v231, 127
    %v236 = vpop.permute.xlu0 %235
    %237 = vrot.lane.b32.xlu0 %v232, 127
    %v238 = vpop.permute.xlu0 %237
    %v239 = vsel %vm170, %v234, %v236
    %v240 = vsel %vm170, %v236, %v238
    %243 = vst [vmem:[#allocation3 + $0x40] sm:$0xf0] %v239
    %244 = vst [vmem:[#allocation3 + $0x48] sm:$0xf0] %v240
    %v245 = vld [vmem:[#allocation2 + $0x4] sm:$0xff]
    %v246 = vld [vmem:[#allocation2 + $0xc] sm:$0xf]
    %s247 = scalar_lea.vmem [#allocation7], 12
    %v248 = vld [vmem:[%s247] sm:$0x3]
    %v250 = vperm.slane %v248, 0
    %v251 = vperm.slane %v248, 1
    %v252 = vrot.slane %v251, 4
    %v253 = vsel %vm63, %v250, %v252
    %254 = vrot.lane.b32.xlu0 %v253, 15
    %v255 = vpop.permute.xlu0 %254
    %v256 = vrot.slane %v255, 4
    %v257 = vsel %vm151, %v256, %v255
    %v260 = vmul.f32 %v245, %v257
    %v261 = vmul.f32 %v246, %v256
    %264 = vst [vmem:[#allocation1] ss:$2 sm:$0xff] %v260
    %s265 = scalar_lea.vmem [#allocation1], 16
    %266 = vst [vmem:[%s265] ss:$2 sm:$0xff] %v261
    %v267 = vld.sshfl [vmem:[#allocation1] sm:$0xff pattern:$0x75316420]
    %v268 = vld.sshfl [vmem:[#allocation1 + $0x8] sm:$0xff pattern:$0x75316420]
    %v269 = vld.sshfl [vmem:[#allocation1 + $0x10] sm:$0xff pattern:$0x75316420]
    %270 = vrot.lane.b32.xlu0 %v267, 113
    %v271 = vpop.permute.xlu0 %270
    %272 = vrot.lane.b32.xlu0 %v268, 113
    %v273 = vpop.permute.xlu0 %272
    %274 = vrot.lane.b32.xlu0 %v269, 113
    %v275 = vpop.permute.xlu0 %274
    %v276 = vsel %vm131, %v271, %v273
    %v277 = vsel %vm131, %v273, %v275
    %280 = vst [vmem:[#allocation3 + $0x60] sm:$0xf] %v276
    %281 = vst [vmem:[#allocation3 + $0x68] sm:$0xf] %v277
    %v282 = vld [vmem:[#allocation2 + $0x4] sm:$0xff]
    %v283 = vld [vmem:[#allocation2 + $0xc] sm:$0xf]
    %s286 = scalar_lea.vmem [#allocation1], 1
    %287 = vst [vmem:[%s286] ss:$2 sm:$0xff] %v282
    %s288 = scalar_lea.vmem [#allocation1], 17
    %289 = vst [vmem:[%s288] ss:$2 sm:$0xff] %v283
    %v290 = vld.sshfl [vmem:[#allocation1] sm:$0xff pattern:$0x75316420]
    %v291 = vld.sshfl [vmem:[#allocation1 + $0x8] sm:$0xff pattern:$0x75316420]
    %v292 = vld.sshfl [vmem:[#allocation1 + $0x10] sm:$0xff pattern:$0x75316420]
    %293 = vrot.lane.b32.xlu0 %v290, 112
    %v294 = vpop.permute.xlu0 %293
    %295 = vrot.lane.b32.xlu0 %v291, 112
    %v296 = vpop.permute.xlu0 %295
    %297 = vrot.lane.b32.xlu0 %v292, 112
    %v298 = vpop.permute.xlu0 %297
    %vm299 = vcmask 916480
    %v300 = vsel %vm299, %v294, %v296
    %v301 = vsel %vm299, %v296, %v298
    %304 = vst [vmem:[#allocation3 + $0x60] sm:$0xf0] %v300
    %305 = vst [vmem:[#allocation3 + $0x68] sm:$0xf0] %v301
    %v306 = vld [vmem:[#allocation2 + $0x4] sm:$0xff]
    %v307 = vld [vmem:[#allocation2 + $0xc] sm:$0xf]
    %s308 = scalar_lea.vmem [#allocation7], 16
    %v309 = vld [vmem:[%s308] sm:$0x3]
    %v311 = vperm.slane %v309, 0
    %v312 = vperm.slane %v309, 1
    %v313 = vrot.slane %v312, 4
    %v314 = vsel %vm63, %v311, %v313
    %315 = vrot.lane.b32.xlu0 %v314, 17
    %v316 = vpop.permute.xlu0 %315
    %v317 = vrot.slane %v316, 4
    %v318 = vsel %vm88, %v317, %v316
    %v321 = vmul.f32 %v306, %v318
    %v322 = vmul.f32 %v307, %v317
    %325 = vst [vmem:[#allocation1] ss:$2 sm:$0xff] %v321
    %s326 = scalar_lea.vmem [#allocation1], 16
    %327 = vst [vmem:[%s326] ss:$2 sm:$0xff] %v322
    %v328 = vld.sshfl [vmem:[#allocation1] sm:$0xff pattern:$0x75316420]
    %v329 = vld.sshfl [vmem:[#allocation1 + $0x8] sm:$0xff pattern:$0x75316420]
    %v330 = vld.sshfl [vmem:[#allocation1 + $0x10] sm:$0xff pattern:$0x75316420]
    %331 = vrot.lane.b32.xlu0 %v328, 111
    %v332 = vpop.permute.xlu0 %331
    %333 = vrot.lane.b32.xlu0 %v329, 111
    %v334 = vpop.permute.xlu0 %333
    %335 = vrot.lane.b32.xlu0 %v330, 111
    %v336 = vpop.permute.xlu0 %335
    %v337 = vsel %vm68, %v332, %v334
    %v338 = vsel %vm68, %v334, %v336
    %341 = vst [vmem:[#allocation3 + $0x80] sm:$0xf] %v337
    %342 = vst [vmem:[#allocation3 + $0x88] sm:$0xf] %v338
    %s343 = scalar_lea.vmem [#allocation4], 8
    %v344 = vld [vmem:[%s343] sm:$0xff]
    %345 = vst [vmem:[#allocation2 + $0x4] sm:$0xff] %v344
    %v346 = vld [vmem:[#allocation2] sm:$0xff]
    %v347 = vld [vmem:[#allocation2 + $0x8] sm:$0xf]
    %v348 = vld [vmem:[#allocation7] sm:$0x3]
    %v350 = vperm.slane %v348, 0
    %v351 = vperm.slane %v348, 1
    %v352 = vrot.slane %v351, 4
    %v353 = vsel %vm63, %v350, %v352
    %354 = vrot.lane.b32.xlu0 %v353, 111
    %v355 = vpop.permute.xlu0 %354
    %v356 = vrot.slane %v355, 4
    %v357 = vsel %vm68, %v356, %v355
    %v360 = vmul.f32 %v346, %v357
    %v361 = vmul.f32 %v347, %v356
    %364 = vst [vmem:[#allocation1] ss:$2 sm:$0xff] %v360
    %s365 = scalar_lea.vmem [#allocation1], 16
    %366 = vst [vmem:[%s365] ss:$2 sm:$0xff] %v361
    %v367 = vld.sshfl [vmem:[#allocation1] sm:$0xff pattern:$0x75316420]
    %v368 = vld.sshfl [vmem:[#allocation1 + $0x8] sm:$0xff pattern:$0x75316420]
    %v369 = vld.sshfl [vmem:[#allocation1 + $0x10] sm:$0xff pattern:$0x75316420]
    %370 = vrot.lane.b32.xlu0 %v367, 17
    %v371 = vpop.permute.xlu0 %370
    %372 = vrot.lane.b32.xlu0 %v368, 17
    %v373 = vpop.permute.xlu0 %372
    %374 = vrot.lane.b32.xlu0 %v369, 17
    %v375 = vpop.permute.xlu0 %374
    %v376 = vsel %vm88, %v371, %v373
    %v377 = vsel %vm88, %v373, %v375
    %380 = vst [vmem:[#allocation3 + $0x10] sm:$0xf] %v376
    %381 = vst [vmem:[#allocation3 + $0x18] sm:$0xf] %v377
    %v382 = vld [vmem:[#allocation2] sm:$0xff]
    %v383 = vld [vmem:[#allocation2 + $0x8] sm:$0xf]
    %s386 = scalar_lea.vmem [#allocation1], 1
    %387 = vst [vmem:[%s386] ss:$2 sm:$0xff] %v382
    %s388 = scalar_lea.vmem [#allocation1], 17
    %389 = vst [vmem:[%s388] ss:$2 sm:$0xff] %v383
    %v390 = vld.sshfl [vmem:[#allocation1] sm:$0xff pattern:$0x75316420]
    %v391 = vld.sshfl [vmem:[#allocation1 + $0x8] sm:$0xff pattern:$0x75316420]
    %v392 = vld.sshfl [vmem:[#allocation1 + $0x10] sm:$0xff pattern:$0x75316420]
    %393 = vrot.lane.b32.xlu0 %v390, 16
    %v394 = vpop.permute.xlu0 %393
    %395 = vrot.lane.b32.xlu0 %v391, 16
    %v396 = vpop.permute.xlu0 %395
    %397 = vrot.lane.b32.xlu0 %v392, 16
    %v398 = vpop.permute.xlu0 %397
    %v399 = vsel %vm112, %v394, %v396
    %v400 = vsel %vm112, %v396, %v398
    %403 = vst [vmem:[#allocation3 + $0x10] sm:$0xf0] %v399
    %404 = vst [vmem:[#allocation3 + $0x18] sm:$0xf0] %v400
    %v405 = vld [vmem:[#allocation2] sm:$0xff]
    %v406 = vld [vmem:[#allocation2 + $0x8] sm:$0xf]
    %v407 = vld [vmem:[%s121] sm:$0x3]
    %v409 = vperm.slane %v407, 0
    %v410 = vperm.slane %v407, 1
    %v411 = vrot.slane %v410, 4
    %v412 = vsel %vm63, %v409, %v411
    %413 = vrot.lane.b32.xlu0 %v412, 113
    %v414 = vpop.permute.xlu0 %413
    %v415 = vrot.slane %v414, 4
    %v416 = vsel %vm131, %v415, %v414
    %v419 = vmul.f32 %v405, %v416
    %v420 = vmul.f32 %v406, %v415
    %423 = vst [vmem:[#allocation1] ss:$2 sm:$0xff] %v419
    %s424 = scalar_lea.vmem [#allocation1], 16
    %425 = vst [vmem:[%s424] ss:$2 sm:$0xff] %v420
    %v426 = vld.sshfl [vmem:[#allocation1] sm:$0xff pattern:$0x75316420]
    %v427 = vld.sshfl [vmem:[#allocation1 + $0x8] sm:$0xff pattern:$0x75316420]
    %v428 = vld.sshfl [vmem:[#allocation1 + $0x10] sm:$0xff pattern:$0x75316420]
    %429 = vrot.lane.b32.xlu0 %v426, 15
    %v430 = vpop.permute.xlu0 %429
    %431 = vrot.lane.b32.xlu0 %v427, 15
    %v432 = vpop.permute.xlu0 %431
    %433 = vrot.lane.b32.xlu0 %v428, 15
    %v434 = vpop.permute.xlu0 %433
    %v435 = vsel %vm151, %v430, %v432
    %v436 = vsel %vm151, %v432, %v434
    %439 = vst [vmem:[#allocation3 + $0x30] sm:$0xf] %v435
    %440 = vst [vmem:[#allocation3 + $0x38] sm:$0xf] %v436
    %v441 = vld [vmem:[#allocation2] sm:$0xff]
    %v442 = vld [vmem:[#allocation2 + $0x8] sm:$0xf]
    %v443 = vld [vmem:[%s160] sm:$0x3]
    %v445 = vperm.slane %v443, 0
    %v446 = vperm.slane %v443, 1
    %v447 = vrot.slane %v446, 4
    %v448 = vsel %vm63, %v445, %v447
    %449 = vrot.lane.b32.xlu0 %v448, 127
    %v450 = vpop.permute.xlu0 %449
    %v451 = vrot.slane %v450, 4
    %v452 = vsel %vm170, %v451, %v450
    %v455 = vmul.f32 %v441, %v452
    %v456 = vmul.f32 %v442, %v451
    %s459 = scalar_lea.vmem [#allocation1], 1
    %460 = vst [vmem:[%s459] ss:$2 sm:$0xff] %v455
    %s461 = scalar_lea.vmem [#allocation1], 17
    %462 = vst [vmem:[%s461] ss:$2 sm:$0xff] %v456
    %v463 = vld.sshfl [vmem:[#allocation1] sm:$0xff pattern:$0x75316420]
    %v464 = vld.sshfl [vmem:[#allocation1 + $0x8] sm:$0xff pattern:$0x75316420]
    %v465 = vld.sshfl [vmem:[#allocation1 + $0x10] sm:$0xff pattern:$0x75316420]
    %466 = vrot.lane.b32.xlu0 %v463, 1
    %v467 = vpop.permute.xlu0 %466
    %468 = vrot.lane.b32.xlu0 %v464, 1
    %v469 = vpop.permute.xlu0 %468
    %470 = vrot.lane.b32.xlu0 %v465, 1
    %v471 = vpop.permute.xlu0 %470
    %v472 = vsel %vm191, %v467, %v469
    %v473 = vsel %vm191, %v469, %v471
    %476 = vst [vmem:[#allocation3 + $0x30] sm:$0xf0] %v472
    %477 = vst [vmem:[#allocation3 + $0x38] sm:$0xf0] %v473
    %v478 = vld [vmem:[#allocation2 + $0x4] sm:$0xff]
    %480 = vst [vmem:[#allocation1] ss:$2 sm:$0xff] %v478
    %v481 = vld.sshfl [vmem:[#allocation1] sm:$0xff pattern:$0x75316420]
    %v482 = vld.sshfl [vmem:[#allocation1 + $0x8] sm:$0xff pattern:$0x75316420]
    %485 = vst [vmem:[#allocation3 + $0x50] sm:$0xf] %v481
    %486 = vst [vmem:[#allocation3 + $0x58] sm:$0xf] %v482
    %v487 = vld [vmem:[#allocation2 + $0x4] sm:$0xff]
    %v488 = vld [vmem:[#allocation2 + $0xc] sm:$0xf]
    %v489 = vld [vmem:[%s209] sm:$0x3]
    %v491 = vperm.slane %v489, 0
    %v492 = vperm.slane %v489, 1
    %v493 = vrot.slane %v492, 4
    %v494 = vsel %vm63, %v491, %v493
    %495 = vrot.lane.b32.xlu0 %v494, 1
    %v496 = vpop.permute.xlu0 %495
    %v497 = vrot.slane %v496, 4
    %v498 = vsel %vm191, %v497, %v496
    %v501 = vmul.f32 %v487, %v498
    %v502 = vmul.f32 %v488, %v497
    %s505 = scalar_lea.vmem [#allocation1], 1
    %506 = vst [vmem:[%s505] ss:$2 sm:$0xff] %v501
    %s507 = scalar_lea.vmem [#allocation1], 17
    %508 = vst [vmem:[%s507] ss:$2 sm:$0xff] %v502
    %v509 = vld.sshfl [vmem:[#allocation1] sm:$0xff pattern:$0x75316420]
    %v510 = vld.sshfl [vmem:[#allocation1 + $0x8] sm:$0xff pattern:$0x75316420]
    %v511 = vld.sshfl [vmem:[#allocation1 + $0x10] sm:$0xff pattern:$0x75316420]
    %512 = vrot.lane.b32.xlu0 %v509, 127
    %v513 = vpop.permute.xlu0 %512
    %514 = vrot.lane.b32.xlu0 %v510, 127
    %v515 = vpop.permute.xlu0 %514
    %516 = vrot.lane.b32.xlu0 %v511, 127
    %v517 = vpop.permute.xlu0 %516
    %v518 = vsel %vm170, %v513, %v515
    %v519 = vsel %vm170, %v515, %v517
    %522 = vst [vmem:[#allocation3 + $0x50] sm:$0xf0] %v518
    %523 = vst [vmem:[#allocation3 + $0x58] sm:$0xf0] %v519
    %v524 = vld [vmem:[#allocation2 + $0x4] sm:$0xff]
    %v525 = vld [vmem:[#allocation2 + $0xc] sm:$0xf]
    %v526 = vld [vmem:[%s247] sm:$0x3]
    %v528 = vperm.slane %v526, 0
    %v529 = vperm.slane %v526, 1
    %v530 = vrot.slane %v529, 4
    %v531 = vsel %vm63, %v528, %v530
    %532 = vrot.lane.b32.xlu0 %v531, 15
    %v533 = vpop.permute.xlu0 %532
    %v534 = vrot.slane %v533, 4
    %v535 = vsel %vm151, %v534, %v533
    %v538 = vmul.f32 %v524, %v535
    %v539 = vmul.f32 %v525, %v534
    %542 = vst [vmem:[#allocation1] ss:$2 sm:$0xff] %v538
    %s543 = scalar_lea.vmem [#allocation1], 16
    %544 = vst [vmem:[%s543] ss:$2 sm:$0xff] %v539
    %v545 = vld.sshfl [vmem:[#allocation1] sm:$0xff pattern:$0x75316420]
    %v546 = vld.sshfl [vmem:[#allocation1 + $0x8] sm:$0xff pattern:$0x75316420]
    %v547 = vld.sshfl [vmem:[#allocation1 + $0x10] sm:$0xff pattern:$0x75316420]
    %548 = vrot.lane.b32.xlu0 %v545, 113
    %v549 = vpop.permute.xlu0 %548
    %550 = vrot.lane.b32.xlu0 %v546, 113
    %v551 = vpop.permute.xlu0 %550
    %552 = vrot.lane.b32.xlu0 %v547, 113
    %v553 = vpop.permute.xlu0 %552
    %v554 = vsel %vm131, %v549, %v551
    %v555 = vsel %vm131, %v551, %v553
    %558 = vst [vmem:[#allocation3 + $0x70] sm:$0xf] %v554
    %559 = vst [vmem:[#allocation3 + $0x78] sm:$0xf] %v555
    %v560 = vld [vmem:[#allocation2 + $0x4] sm:$0xff]
    %v561 = vld [vmem:[#allocation2 + $0xc] sm:$0xf]
    %s564 = scalar_lea.vmem [#allocation1], 1
    %565 = vst [vmem:[%s564] ss:$2 sm:$0xff] %v560
    %s566 = scalar_lea.vmem [#allocation1], 17
    %567 = vst [vmem:[%s566] ss:$2 sm:$0xff] %v561
    %v568 = vld.sshfl [vmem:[#allocation1] sm:$0xff pattern:$0x75316420]
    %v569 = vld.sshfl [vmem:[#allocation1 + $0x8] sm:$0xff pattern:$0x75316420]
    %v570 = vld.sshfl [vmem:[#allocation1 + $0x10] sm:$0xff pattern:$0x75316420]
    %571 = vrot.lane.b32.xlu0 %v568, 112
    %v572 = vpop.permute.xlu0 %571
    %573 = vrot.lane.b32.xlu0 %v569, 112
    %v574 = vpop.permute.xlu0 %573
    %575 = vrot.lane.b32.xlu0 %v570, 112
    %v576 = vpop.permute.xlu0 %575
    %v577 = vsel %vm299, %v572, %v574
    %v578 = vsel %vm299, %v574, %v576
    %581 = vst [vmem:[#allocation3 + $0x70] sm:$0xf0] %v577
    %582 = vst [vmem:[#allocation3 + $0x78] sm:$0xf0] %v578
    %v583 = vld [vmem:[#allocation2 + $0x4] sm:$0xff]
    %v584 = vld [vmem:[#allocation2 + $0xc] sm:$0xf]
    %v585 = vld [vmem:[%s308] sm:$0x3]
    %v587 = vperm.slane %v585, 0
    %v588 = vperm.slane %v585, 1
    %v589 = vrot.slane %v588, 4
    %v590 = vsel %vm63, %v587, %v589
    %591 = vrot.lane.b32.xlu0 %v590, 17
    %v592 = vpop.permute.xlu0 %591
    %v593 = vrot.slane %v592, 4
    %v594 = vsel %vm88, %v593, %v592
    %v597 = vmul.f32 %v583, %v594
    %v598 = vmul.f32 %v584, %v593
    %601 = vst [vmem:[#allocation1] ss:$2 sm:$0xff] %v597
    %s602 = scalar_lea.vmem [#allocation1], 16
    %603 = vst [vmem:[%s602] ss:$2 sm:$0xff] %v598
    %v604 = vld.sshfl [vmem:[#allocation1] sm:$0xff pattern:$0x75316420]
    %v605 = vld.sshfl [vmem:[#allocation1 + $0x8] sm:$0xff pattern:$0x75316420]
    %v606 = vld.sshfl [vmem:[#allocation1 + $0x10] sm:$0xff pattern:$0x75316420]
    %607 = vrot.lane.b32.xlu0 %v604, 111
    %v608 = vpop.permute.xlu0 %607
    %609 = vrot.lane.b32.xlu0 %v605, 111
    %v610 = vpop.permute.xlu0 %609
    %611 = vrot.lane.b32.xlu0 %v606, 111
    %v612 = vpop.permute.xlu0 %611
    %v613 = vsel %vm68, %v608, %v610
    %v614 = vsel %vm68, %v610, %v612
    %617 = vst [vmem:[#allocation3 + $0x90] sm:$0xf] %v613
    %618 = vst [vmem:[#allocation3 + $0x98] sm:$0xf] %v614
    %v619 = vld [vmem:[#allocation3] sm:$0xff]
    %v620 = vld [vmem:[#allocation3 + $0x8] sm:$0xff]
    %v621 = vld [vmem:[#allocation3 + $0x10] sm:$0xff]
    %v622 = vld [vmem:[#allocation3 + $0x18] sm:$0xff]
    %v623 = vld [vmem:[#allocation3 + $0x20] sm:$0xff]
    %v624 = vld [vmem:[#allocation3 + $0x28] sm:$0xff]
    %v625 = vld [vmem:[#allocation3 + $0x30] sm:$0xff]
    %v626 = vld [vmem:[#allocation3 + $0x38] sm:$0xff]
    %v627 = vld [vmem:[#allocation3 + $0x40] sm:$0xff]
    %v628 = vld [vmem:[#allocation3 + $0x48] sm:$0xff]
    %v629 = vld [vmem:[#allocation3 + $0x50] sm:$0xff]
    %v630 = vld [vmem:[#allocation3 + $0x58] sm:$0xff]
    %v631 = vld [vmem:[#allocation3 + $0x60] sm:$0xff]
    %v632 = vld [vmem:[#allocation3 + $0x68] sm:$0xff]
    %v633 = vld [vmem:[#allocation3 + $0x70] sm:$0xff]
    %v634 = vld [vmem:[#allocation3 + $0x78] sm:$0xff]
    %v635 = vld [vmem:[#allocation3 + $0x80] sm:$0xf]
    %v636 = vld [vmem:[#allocation3 + $0x88] sm:$0xf]
    %v637 = vld [vmem:[#allocation3 + $0x90] sm:$0xf]
    %v638 = vld [vmem:[#allocation3 + $0x98] sm:$0xf]
    %640 = vset.pattern.permute.xlu0 0
    %641 = vperm.xlu0 %640, %v51
    %v642 = vpop.permute.xlu0 %641
    %vm644 = vcmask 293888
    %v646 = vsel %vm644, %v50, 0
    %v649 = vsel %vm63, %v635, 0
    %v652 = vsel %vm63, %v636, 0
    %v655 = vsel %vm63, %v637, 0
    %v658 = vsel %vm63, %v638, 0
    %660 = vmatpush.msra.mxu0 0.0
    %661 = vmatpush.msra.mxu0 0.0
    %662 = vmatpush.msra.mxu0 0.0
    %663 = vmatpush.msra.mxu0 0.0
    %664 = vmatpush.msra.mxu0 0.0
    %665 = vmatpush.msra.mxu0 0.0
    %666 = vmatpush.msra.mxu0 0.0
    %667 = vmatpush.msra.mxu0 0.0
    %668 = vmatpush.msra.mxu0 0.0
    %669 = vmatpush.msra.mxu0 0.0
    %670 = vmatpush.msra.mxu0 0.0
    %671 = vmatpush.msra.mxu0 %v649
    %672 = vmatpush.msra.mxu0 %v631
    %673 = vmatpush.msra.mxu0 %v627
    %674 = vmatpush.msra.mxu0 %v623
    %675 = vmatpush.msra.mxu0 %v619
    %676 = vmatmul.f32.gmra.mxu0 %v646
    %v677 = vpop.f32.mrf.mxu0
    %v678 = vadd.f32 %v642, %v677
    %679 = vdwg.mxu0
    %680 = vmatpush.msra.mxu0 0.0
    %681 = vmatpush.msra.mxu0 0.0
    %682 = vmatpush.msra.mxu0 0.0
    %683 = vmatpush.msra.mxu0 0.0
    %684 = vmatpush.msra.mxu0 0.0
    %685 = vmatpush.msra.mxu0 0.0
    %686 = vmatpush.msra.mxu0 0.0
    %687 = vmatpush.msra.mxu0 0.0
    %688 = vmatpush.msra.mxu0 0.0
    %689 = vmatpush.msra.mxu0 0.0
    %690 = vmatpush.msra.mxu0 0.0
    %691 = vmatpush.msra.mxu0 %v652
    %692 = vmatpush.msra.mxu0 %v632
    %693 = vmatpush.msra.mxu0 %v628
    %694 = vmatpush.msra.mxu0 %v624
    %695 = vmatpush.msra.mxu0 %v620
    %696 = vmatmul.f32.gmra.mxu0 %v646
    %v697 = vpop.f32.mrf.mxu0
    %v698 = vadd.f32 %v642, %v697
    %699 = vdwg.mxu0
    %700 = vmatpush.msra.mxu0 0.0
    %701 = vmatpush.msra.mxu0 0.0
    %702 = vmatpush.msra.mxu0 0.0
    %703 = vmatpush.msra.mxu0 0.0
    %704 = vmatpush.msra.mxu0 0.0
    %705 = vmatpush.msra.mxu0 0.0
    %706 = vmatpush.msra.mxu0 0.0
    %707 = vmatpush.msra.mxu0 0.0
    %708 = vmatpush.msra.mxu0 0.0
    %709 = vmatpush.msra.mxu0 0.0
    %710 = vmatpush.msra.mxu0 0.0
    %711 = vmatpush.msra.mxu0 %v655
    %712 = vmatpush.msra.mxu0 %v633
    %713 = vmatpush.msra.mxu0 %v629
    %714 = vmatpush.msra.mxu0 %v625
    %715 = vmatpush.msra.mxu0 %v621
    %716 = vmatmul.f32.gmra.mxu0 %v646
    %v717 = vpop.f32.mrf.mxu0
    %v718 = vadd.f32 %v642, %v717
    %719 = vdwg.mxu0
    %720 = vmatpush.msra.mxu0 0.0
    %721 = vmatpush.msra.mxu0 0.0
    %722 = vmatpush.msra.mxu0 0.0
    %723 = vmatpush.msra.mxu0 0.0
    %724 = vmatpush.msra.mxu0 0.0
    %725 = vmatpush.msra.mxu0 0.0
    %726 = vmatpush.msra.mxu0 0.0
    %727 = vmatpush.msra.mxu0 0.0
    %728 = vmatpush.msra.mxu0 0.0
    %729 = vmatpush.msra.mxu0 0.0
    %730 = vmatpush.msra.mxu0 0.0
    %731 = vmatpush.msra.mxu0 %v658
    %732 = vmatpush.msra.mxu0 %v634
    %733 = vmatpush.msra.mxu0 %v630
    %734 = vmatpush.msra.mxu0 %v626
    %735 = vmatpush.msra.mxu0 %v622
    %736 = vmatmul.f32.gmra.mxu0 %v646
    %v737 = vpop.f32.mrf.mxu0
    %v738 = vadd.f32 %v642, %v737
    %739 = vdwg.mxu0
    %v740 = vmax.f32 %v678, 0.0
    %v741 = vmax.f32 %v698, 0.0
    %v742 = vmax.f32 %v718, 0.0
    %v743 = vmax.f32 %v738, 0.0
    %744 = vst [vmem:[#allocation9] sm:$0xff] %v740
    %745 = vst [vmem:[#allocation9 + $0x8] sm:$0xff] %v741
    %s746 = scalar_lea.vmem [#allocation9], 16
    %747 = vst [vmem:[%s746] sm:$0xff] %v742
    %748 = vst [vmem:[%s746 + $0x8] sm:$0xff] %v743
    // Predicated region
    $region26: #{tpu_custom_call.1} parent=1 // pred_check
      _
    $region27: #{tpu_custom_call.1} parent=1 // pred_check_branch
      %750 = sbr.rel (0) target = $region29
    $region28: #{tpu_custom_call.1} parent=1 // pred_region
      %752 = vsyncadd [#allocation6], 0
      %s753 = sshll.u32 [#allocation9], 4
      %s754 = int_to_ptr.vmem [resolvable:$true] %s753
      %s755 = sshll.u32 %s4, 4
      %s756 = int_to_ptr.hbm [resolvable:$true] %s755
      %761 = dma.vmem_to_hbm [thread:$0]  %s754, 512, %s756, [#allocation6], 256, 256, 16
    $region29: #{tpu_custom_call.1} parent=1 // pred_fallthru
      _
    // Predicated region
    $region30: #{tpu_custom_call.1} parent=1 // pred_check
      _
    $region31: #{tpu_custom_call.1} parent=1 // pred_check_branch
      %763 = sbr.rel (0) target = $region33
    $region32: #{tpu_custom_call.1} parent=1 // pred_region
      %765 = dma.done [#allocation6], 512
    $region33: #{tpu_custom_call.1} parent=1 // pred_fallthru
      _
    %766 = vsyncpa [#allocation5], 1
    %767 = vsyncpa [#allocation8], 1
    %768 = vsyncpa [#allocation6], 1

</llo_original>
